<compile_context>
chip_gen: v6e
topology: v6e:2x2x1
jax: 0.10.0
libtpu: 0.0.40
codegen_flags: <defaults>
</compile_context>

<pallas_src>
import functools

import jax
import jax.numpy as jnp
from jax.experimental import pallas as pl
from jax.experimental.pallas import tpu as pltpu

EPS = 1e-5          # BatchNorm2d default eps
NEG_SLOPE = 0.2     # LeakyReLU negative slope
K = 3               # kernel_size=3, stride=1, padding=1


def _round_up(x, m):
    return (x + m - 1) // m * m


def _decoder_block_kernel(x_ref, w_ref, g_ref, b_ref, m_ref, o_ref, col_ref,
                          *, wp, l_out, k, cin_pad, inv_count):
    """Conv(3x3) + training-mode BN + LeakyReLU on a channel-major flat layout.

    x_ref   : (cin_pad, LX)          channel-major flat padded frames (single copy)
    w_ref   : (Cout, k*k*cin_pad)    im2col weights (zero columns for padded channels)
    g_ref   : (Cout, 1)              BN gamma
    b_ref   : (Cout, 1)              BN beta
    m_ref   : (1, l_out)             1.0 at valid conv-output positions, 0.0 at frame padding
    o_ref   : (Cout, l_out)          lane-dense output slab
    col_ref : (k*k*cin_pad, l_out)   VMEM scratch: im2col operand built in the prologue
    """
    # ---- prologue: build the 9-tap im2col operand once in VMEM scratch --------------
    # Static-offset copies; every row block is a full sublane multiple (cin_pad % 8 == 0),
    # so the stores are aligned and the single matmul below reads the operand at offset 0.
    for tap in range(k * k):                       # static, fully unrolled
        dh, dw = divmod(tap, k)
        off = dh * wp + dw
        col_ref[tap * cin_pad:(tap + 1) * cin_pad, :] = x_ref[:, off:off + l_out]

    # ---- conv: one MXU matmul with contraction depth k*k*cin_pad ---------------------
    acc = jnp.dot(w_ref[...], col_ref[...], preferred_element_type=jnp.float32)

    # ---- training-mode BatchNorm2d (biased batch stats), two-pass --------------------
    mask = m_ref[...]
    acc_m = acc * mask
    mean = jnp.sum(acc_m, axis=1, keepdims=True) * inv_count          # (Cout, 1)
    centered = acc - mean
    cm = centered * mask
    var = jnp.sum(cm * centered, axis=1, keepdims=True) * inv_count   # (Cout, 1)

    y = centered * (jax.lax.rsqrt(var + EPS) * g_ref[...]) + b_ref[...]

    # LeakyReLU(0.2): max(y, 0.2*y) is a single VALU op (vs compare+select).
    o_ref[...] = jnp.maximum(y, NEG_SLOPE * y)


def decoder_block(x_nchw, w_oihw, bias, gamma, beta):
    """DecoderBlock forward. x_nchw: (N, Cin, H, W) f32 -> (N, Cout, H, W) f32."""
    N, Cin, H, W = x_nchw.shape
    Cout = w_oihw.shape[0]
    Hp, Wp = H + 2, W + 2          # zero-padded frame (padding=1)
    F = Hp * Wp                    # flat frame length per image
    n_valid = N * H * W            # BN population size
    Cin_pad = _round_up(Cin, 8)    # sublane-aligned per-tap channel block

    # Output slab covers all N*F flat positions, rounded to a 128-lane multiple.
    L_OUT = _round_up(N * F, 128)
    MAX_OFF = (K - 1) * Wp + (K - 1)                 # largest tap shift (dh*Wp + dw)
    LX = _round_up(L_OUT + MAX_OFF, 128)             # input slab length
    # Static slab invariants (keep future shape changes from silently reading OOB).
    assert L_OUT >= N * F, (L_OUT, N * F)
    assert L_OUT + MAX_OFF <= LX, (L_OUT, MAX_OFF, LX)

    # ---- wrapper-side layout plumbing (tiny tensors) --------------------------------
    # Channel-major, zero-padded, flattened frames: x_flat[ci, n*F + r*Wp + c].  Passed ONCE.
    x_pad = jnp.pad(x_nchw, ((0, 0), (0, 0), (1, 1), (1, 1))).astype(jnp.float32)
    x_flat = jnp.transpose(x_pad, (1, 0, 2, 3)).reshape(Cin, N * F)
    x_flat = jnp.pad(x_flat, ((0, Cin_pad - Cin), (0, LX - N * F)))

    # im2col weights: wk[co, tap*Cin_pad + ci] = w[co, ci, dh, dw]; zero on padded channels.
    wk = jnp.transpose(w_oihw.astype(jnp.float32), (0, 2, 3, 1)).reshape(Cout, K * K, Cin)
    wk = jnp.pad(wk, ((0, 0), (0, 0), (0, Cin_pad - Cin))).reshape(Cout, K * K * Cin_pad)

    # Validity mask over the output slab (1.0 at real conv outputs, 0.0 at frame padding).
    valid = jnp.zeros((N, Hp, Wp), jnp.float32).at[:, :H, :W].set(1.0)
    mask = jnp.pad(valid.reshape(1, N * F), ((0, 0), (0, L_OUT - N * F)))

    g = gamma.reshape(Cout, 1).astype(jnp.float32)
    b = beta.reshape(Cout, 1).astype(jnp.float32)
    # Conv bias is intentionally NOT passed: a per-channel constant added before
    # training-mode BatchNorm is exactly cancelled by the mean subtraction.
    del bias

    kernel = functools.partial(_decoder_block_kernel,
                               wp=Wp, l_out=L_OUT, k=K, cin_pad=Cin_pad,
                               inv_count=1.0 / n_valid)

    vmem = pl.BlockSpec(memory_space=pltpu.MemorySpace.VMEM)
    out_flat = pl.pallas_call(
        kernel,
        out_shape=jax.ShapeDtypeStruct((Cout, L_OUT), jnp.float32),
        in_specs=[vmem] * 5,
        out_specs=vmem,
        scratch_shapes=[pltpu.VMEM((K * K * Cin_pad, L_OUT), jnp.float32)],
    )(x_flat, wk, g, b, mask)

    # ---- back to PyTorch NCHW (L_OUT >= N*F is guaranteed above) --------------------
    out_nchw = (out_flat[:, :N * F].reshape(Cout, N, Hp, Wp)[:, :, :H, :W]
                .transpose(1, 0, 2, 3))
    return out_nchw


# ---------------------------------------------------------------------------
# Pure-JAX reference (exact PyTorch forward math, incl. the conv bias) for a check.
def _ref_decoder_block(x_nchw, w_oihw, bias, gamma, beta):
    out = jax.lax.conv_general_dilated(
        x_nchw, w_oihw, window_strides=(1, 1), padding=((1, 1), (1, 1)),
        dimension_numbers=("NCHW", "OIHW", "NCHW"))
    out = out + bias.reshape(1, -1, 1, 1)
    mean = out.mean(axis=(0, 2, 3), keepdims=True)
    var = ((out - mean) ** 2).mean(axis=(0, 2, 3), keepdims=True)
    y = (out - mean) / jnp.sqrt(var + EPS) * gamma.reshape(1, -1, 1, 1) \
        + beta.reshape(1, -1, 1, 1)
    return jnp.where(y >= 0, y, NEG_SLOPE * y)


if __name__ == "__main__":
    key = jax.random.PRNGKey(0)
    kx, kw, kb, kg, kbe = jax.random.split(key, 5)

    N, Cin, Cout, H, W = 2, 4, 8, 16, 16

    # Inputs in PyTorch conventions: NCHW activations, OIHW conv weights.
    x = jax.random.normal(kx, (N, Cin, H, W), jnp.float32)
    fan_in = Cin * K * K
    bound = 1.0 / float(jnp.sqrt(jnp.float32(fan_in)))
    w = jax.random.uniform(kw, (Cout, Cin, K, K), jnp.float32, -bound, bound)
    bias = jax.random.uniform(kb, (Cout,), jnp.float32, -bound, bound)
    gamma = jax.random.uniform(kg, (Cout,), jnp.float32, 0.5, 1.5)
    beta = jax.random.uniform(kbe, (Cout,), jnp.float32, -0.1, 0.1)

    out = decoder_block(x, w, bias, gamma, beta)
    jax.block_until_ready(out)

    ref = _ref_decoder_block(x, w, bias, gamma, beta)
    assert out.shape == (N, Cout, H, W)
    assert jnp.allclose(out, ref, atol=1e-4, rtol=1e-4), \
        float(jnp.max(jnp.abs(out - ref)))

    print("KERNEL_OK")
</pallas_src>

<mosaic_0001>
module attributes {stable_mosaic.version = 11 : i64} {
  func.func @_decoder_block_kernel(%arg0: memref<8x896xf32, #tpu.memory_space<vmem>>, %arg1: memref<8x72xf32, #tpu.memory_space<vmem>>, %arg2: memref<8x1xf32, #tpu.memory_space<vmem>>, %arg3: memref<8x1xf32, #tpu.memory_space<vmem>>, %arg4: memref<1x768xf32, #tpu.memory_space<vmem>>, %arg5: memref<8x768xf32, #tpu.memory_space<vmem>>, %arg6: memref<72x768xf32, #tpu.memory_space<vmem>>) attributes {dimension_semantics = [], scalar_prefetch = 0 : i64, scratch_operands = 1 : i64, tpu.core_type = #tpu.core_type<tc>} {
    %c0 = arith.constant 0 : index
    %c0_0 = arith.constant 0 : index
    %0 = vector.load %arg0[%c0, %c0_0] : memref<8x896xf32, #tpu.memory_space<vmem>>, vector<8x768xf32>
    %c0_1 = arith.constant 0 : index
    %c0_2 = arith.constant 0 : index
    %1 = vector.load %arg6[%c0_1, %c0_2] : memref<72x768xf32, #tpu.memory_space<vmem>>, vector<8x768xf32>
    tpu.vector_store %arg6[%c0_1, %c0_2], %0 {strides = array<i32>} : memref<72x768xf32, #tpu.memory_space<vmem>>, vector<8x768xf32>,
    %c0_3 = arith.constant 0 : index
    %c1 = arith.constant 1 : index
    %2 = vector.load %arg0[%c0_3, %c1] : memref<8x896xf32, #tpu.memory_space<vmem>>, vector<8x768xf32>
    %c8 = arith.constant 8 : index
    %c0_4 = arith.constant 0 : index
    %3 = vector.load %arg6[%c8, %c0_4] : memref<72x768xf32, #tpu.memory_space<vmem>>, vector<8x768xf32>
    tpu.vector_store %arg6[%c8, %c0_4], %2 {strides = array<i32>} : memref<72x768xf32, #tpu.memory_space<vmem>>, vector<8x768xf32>,
    %c0_5 = arith.constant 0 : index
    %c2 = arith.constant 2 : index
    %4 = vector.load %arg0[%c0_5, %c2] : memref<8x896xf32, #tpu.memory_space<vmem>>, vector<8x768xf32>
    %c16 = arith.constant 16 : index
    %c0_6 = arith.constant 0 : index
    %5 = vector.load %arg6[%c16, %c0_6] : memref<72x768xf32, #tpu.memory_space<vmem>>, vector<8x768xf32>
    tpu.vector_store %arg6[%c16, %c0_6], %4 {strides = array<i32>} : memref<72x768xf32, #tpu.memory_space<vmem>>, vector<8x768xf32>,
    %c0_7 = arith.constant 0 : index
    %c18 = arith.constant 18 : index
    %6 = vector.load %arg0[%c0_7, %c18] : memref<8x896xf32, #tpu.memory_space<vmem>>, vector<8x768xf32>
    %c24 = arith.constant 24 : index
    %c0_8 = arith.constant 0 : index
    %7 = vector.load %arg6[%c24, %c0_8] : memref<72x768xf32, #tpu.memory_space<vmem>>, vector<8x768xf32>
    tpu.vector_store %arg6[%c24, %c0_8], %6 {strides = array<i32>} : memref<72x768xf32, #tpu.memory_space<vmem>>, vector<8x768xf32>,
    %c0_9 = arith.constant 0 : index
    %c19 = arith.constant 19 : index
    %8 = vector.load %arg0[%c0_9, %c19] : memref<8x896xf32, #tpu.memory_space<vmem>>, vector<8x768xf32>
    %c32 = arith.constant 32 : index
    %c0_10 = arith.constant 0 : index
    %9 = vector.load %arg6[%c32, %c0_10] : memref<72x768xf32, #tpu.memory_space<vmem>>, vector<8x768xf32>
    tpu.vector_store %arg6[%c32, %c0_10], %8 {strides = array<i32>} : memref<72x768xf32, #tpu.memory_space<vmem>>, vector<8x768xf32>,
    %c0_11 = arith.constant 0 : index
    %c20 = arith.constant 20 : index
    %10 = vector.load %arg0[%c0_11, %c20] : memref<8x896xf32, #tpu.memory_space<vmem>>, vector<8x768xf32>
    %c40 = arith.constant 40 : index
    %c0_12 = arith.constant 0 : index
    %11 = vector.load %arg6[%c40, %c0_12] : memref<72x768xf32, #tpu.memory_space<vmem>>, vector<8x768xf32>
    tpu.vector_store %arg6[%c40, %c0_12], %10 {strides = array<i32>} : memref<72x768xf32, #tpu.memory_space<vmem>>, vector<8x768xf32>,
    %c0_13 = arith.constant 0 : index
    %c36 = arith.constant 36 : index
    %12 = vector.load %arg0[%c0_13, %c36] : memref<8x896xf32, #tpu.memory_space<vmem>>, vector<8x768xf32>
    %c48 = arith.constant 48 : index
    %c0_14 = arith.constant 0 : index
    %13 = vector.load %arg6[%c48, %c0_14] : memref<72x768xf32, #tpu.memory_space<vmem>>, vector<8x768xf32>
    tpu.vector_store %arg6[%c48, %c0_14], %12 {strides = array<i32>} : memref<72x768xf32, #tpu.memory_space<vmem>>, vector<8x768xf32>,
    %c0_15 = arith.constant 0 : index
    %c37 = arith.constant 37 : index
    %14 = vector.load %arg0[%c0_15, %c37] : memref<8x896xf32, #tpu.memory_space<vmem>>, vector<8x768xf32>
    %c56 = arith.constant 56 : index
    %c0_16 = arith.constant 0 : index
    %15 = vector.load %arg6[%c56, %c0_16] : memref<72x768xf32, #tpu.memory_space<vmem>>, vector<8x768xf32>
    tpu.vector_store %arg6[%c56, %c0_16], %14 {strides = array<i32>} : memref<72x768xf32, #tpu.memory_space<vmem>>, vector<8x768xf32>,
    %c0_17 = arith.constant 0 : index
    %c38 = arith.constant 38 : index
    %16 = vector.load %arg0[%c0_17, %c38] : memref<8x896xf32, #tpu.memory_space<vmem>>, vector<8x768xf32>
    %c64 = arith.constant 64 : index
    %c0_18 = arith.constant 0 : index
    %17 = vector.load %arg6[%c64, %c0_18] : memref<72x768xf32, #tpu.memory_space<vmem>>, vector<8x768xf32>
    tpu.vector_store %arg6[%c64, %c0_18], %16 {strides = array<i32>} : memref<72x768xf32, #tpu.memory_space<vmem>>, vector<8x768xf32>,
    %c0_19 = arith.constant 0 : index
    %c0_20 = arith.constant 0 : index
    %18 = vector.load %arg1[%c0_19, %c0_20] : memref<8x72xf32, #tpu.memory_space<vmem>>, vector<8x72xf32>
    %c0_21 = arith.constant 0 : index
    %c0_22 = arith.constant 0 : index
    %19 = vector.load %arg6[%c0_21, %c0_22] : memref<72x768xf32, #tpu.memory_space<vmem>>, vector<72x768xf32>
    %cst = arith.constant dense<0.000000e+00> : vector<8x768xf32>
    %20 = tpu.matmul %18, %19, %cst {dimension_numbers = #tpu.dot_dimension_numbers<[1], [0], [0], [1], [0, 0, 1, 1], [], []>} : vector<8x72xf32>, vector<72x768xf32>, vector<8x768xf32> -> vector<8x768xf32>
    %c0_23 = arith.constant 0 : index
    %c0_24 = arith.constant 0 : index
    %21 = vector.load %arg4[%c0_23, %c0_24] : memref<1x768xf32, #tpu.memory_space<vmem>>, vector<1x768xf32>
    %22 = vector.broadcast %21 : vector<1x768xf32> to vector<8x768xf32>
    %23 = arith.mulf %20, %22 : vector<8x768xf32>
    %cst_25 = arith.constant dense<0.000000e+00> : vector<8xf32>
    %24 = vector.multi_reduction <add>, %23, %cst_25 [1] : vector<8x768xf32> to vector<8xf32>
    %25 = vector.shape_cast %24 : vector<8xf32> to vector<8x1xf32>
    %cst_26 = arith.constant 0.001953125 : f32
    %26 = vector.broadcast %cst_26 : f32 to vector<8x1xf32>
    %27 = arith.mulf %25, %26 : vector<8x1xf32>
    %28 = vector.broadcast %27 : vector<8x1xf32> to vector<8x768xf32>
    %29 = arith.subf %20, %28 : vector<8x768xf32>
    %30 = vector.broadcast %21 : vector<1x768xf32> to vector<8x768xf32>
    %31 = arith.mulf %29, %30 : vector<8x768xf32>
    %32 = arith.mulf %31, %29 : vector<8x768xf32>
    %cst_27 = arith.constant dense<0.000000e+00> : vector<8xf32>
    %33 = vector.multi_reduction <add>, %32, %cst_27 [1] : vector<8x768xf32> to vector<8xf32>
    %34 = vector.shape_cast %33 : vector<8xf32> to vector<8x1xf32>
    %cst_28 = arith.constant 0.001953125 : f32
    %35 = vector.broadcast %cst_28 : f32 to vector<8x1xf32>
    %36 = arith.mulf %34, %35 : vector<8x1xf32>
    %cst_29 = arith.constant 9.99999974E-6 : f32
    %37 = vector.broadcast %cst_29 : f32 to vector<8x1xf32>
    %38 = arith.addf %36, %37 : vector<8x1xf32>
    %39 = math.rsqrt %38 : vector<8x1xf32>
    %c0_30 = arith.constant 0 : index
    %c0_31 = arith.constant 0 : index
    %40 = vector.load %arg2[%c0_30, %c0_31] : memref<8x1xf32, #tpu.memory_space<vmem>>, vector<8x1xf32>
    %41 = arith.mulf %39, %40 : vector<8x1xf32>
    %42 = vector.broadcast %41 : vector<8x1xf32> to vector<8x768xf32>
    %43 = arith.mulf %29, %42 : vector<8x768xf32>
    %c0_32 = arith.constant 0 : index
    %c0_33 = arith.constant 0 : index
    %44 = vector.load %arg3[%c0_32, %c0_33] : memref<8x1xf32, #tpu.memory_space<vmem>>, vector<8x1xf32>
    %45 = vector.broadcast %44 : vector<8x1xf32> to vector<8x768xf32>
    %46 = arith.addf %43, %45 : vector<8x768xf32>
    %cst_34 = arith.constant 2.000000e-01 : f32
    %47 = vector.broadcast %cst_34 : f32 to vector<8x768xf32>
    %48 = arith.mulf %47, %46 : vector<8x768xf32>
    %49 = arith.maximumf %46, %48 : vector<8x768xf32>
    %c0_35 = arith.constant 0 : index
    %c0_36 = arith.constant 0 : index
    %50 = vector.load %arg5[%c0_35, %c0_36] : memref<8x768xf32, #tpu.memory_space<vmem>>, vector<8x768xf32>
    tpu.vector_store %arg5[%c0_35, %c0_36], %49 {strides = array<i32>} : memref<8x768xf32, #tpu.memory_space<vmem>>, vector<8x768xf32>,
    return
  }
}

</mosaic_0001>

<llo_original>
// kernel: tpu_custom_call.1
$region0: #{tpu_custom_call.1}
  #allocation0 [shape = 'u32[]', space=smem, size = 0x4, offset = 0x4, fixed_abs, tag = 'smem constant byte address 0x4 - core index']
  #allocation1 [shape = 'u32[144,128]{1,0:T(1,128)}', space=vmem, size = 0x12000, scoped, tag = 'internal scratch']
  #allocation2 [shape = 'f32[72,768]{1,0:T(8,128)}', space=vmem, size = 0x36000, scoped, tag = 'scratch operand']
  %s0 = inlined_call_operand.hbm [shape: f32[8,896], index: 0, kind: input, shape index: {}]
  %s1 = inlined_call_operand.vmem [shape: f32[8,72], index: 1, kind: input, shape index: {}]
  %s2 = inlined_call_operand.vmem [shape: f32[8,1], index: 2, kind: input, shape index: {}]
  %s3 = inlined_call_operand.vmem [shape: f32[8,1], index: 3, kind: input, shape index: {}]
  %s4 = inlined_call_operand.vmem [shape: f32[1,768], index: 4, kind: input, shape index: {}]
  %s5 = inlined_call_operand.hbm [shape: f32[8,768], index: 5, kind: output, shape index: {}]
  %s6 = sld [smem:[#allocation0]]
  $region34: #{tpu_custom_call.1} parent=0
    _
  %s8 = ssub.s32 1, %s6
  %s9 = scalar_select 0, %s8, %s6
  $region1: #{tpu_custom_call.1} parent=0
    #allocation3 [shape = 'u8[28672]{0}', space=vmem, size = 0x7000, scoped, tag = 'input window, operand 0, single buffered']
    #allocation4 [shape = 's32[1]{0}', space=sflag, size = 0x4, scoped, tag = 'scoped memory for tpu_custom_call.1']
    #allocation5 [shape = 's32[1]{0}', space=sflag, size = 0x4, scoped, tag = 'scoped memory for tpu_custom_call.1']
    #allocation6 [shape = 'u8[24576]{0}', space=vmem, size = 0x6000, scoped, tag = 'output window, operand 0, single buffered']
    %10 = vsyncpa [#allocation4], 0
    %11 = vsyncpa [#allocation5], 0
    // Predicated region
    $region2: #{tpu_custom_call.1} parent=1 // pred_check
      _
    $region3: #{tpu_custom_call.1} parent=1 // pred_check_branch
      %13 = sbr.rel (0) target = $region5
    $region4: #{tpu_custom_call.1} parent=1 // pred_region
      %s15 = ssub.s32 896, 896
      %16 = vsyncadd [#allocation4], %s15
      %s18 = sshll.u32 [#allocation3], 4
      %s19 = int_to_ptr.vmem [resolvable:$true] %s18
      %21 = dma.hbm_to_vmem [thread:$0]  %s0, 896, %s19, [#allocation4]
    $region5: #{tpu_custom_call.1} parent=1 // pred_fallthru
      _
    // Predicated region
    $region6: #{tpu_custom_call.1} parent=1 // pred_check
      _
    $region7: #{tpu_custom_call.1} parent=1 // pred_check_branch
      %23 = sbr.rel (0) target = $region9
    $region8: #{tpu_custom_call.1} parent=1 // pred_region
      _
    $region9: #{tpu_custom_call.1} parent=1 // pred_fallthru
      _
    // Predicated region
    $region10: #{tpu_custom_call.1} parent=1 // pred_check
      _
    $region11: #{tpu_custom_call.1} parent=1 // pred_check_branch
      %25 = sbr.rel (0) target = $region13
    $region12: #{tpu_custom_call.1} parent=1 // pred_region
      _
    $region13: #{tpu_custom_call.1} parent=1 // pred_fallthru
      _
    // Predicated region
    $region14: #{tpu_custom_call.1} parent=1 // pred_check
      _
    $region15: #{tpu_custom_call.1} parent=1 // pred_check_branch
      %27 = sbr.rel (0) target = $region17
    $region16: #{tpu_custom_call.1} parent=1 // pred_region
      _
    $region17: #{tpu_custom_call.1} parent=1 // pred_fallthru
      _
    // Predicated region
    $region18: #{tpu_custom_call.1} parent=1 // pred_check
      _
    $region19: #{tpu_custom_call.1} parent=1 // pred_check_branch
      %29 = sbr.rel (0) target = $region21
    $region20: #{tpu_custom_call.1} parent=1 // pred_region
      _
    $region21: #{tpu_custom_call.1} parent=1 // pred_fallthru
      _
    // Predicated region
    $region22: #{tpu_custom_call.1} parent=1 // pred_check
      _
    $region23: #{tpu_custom_call.1} parent=1 // pred_check_branch
      %31 = sbr.rel (0) target = $region25
    $region24: #{tpu_custom_call.1} parent=1 // pred_region
      %32 = dma.done [#allocation4], 896
    $region25: #{tpu_custom_call.1} parent=1 // pred_fallthru
      _
    %v33 = vld [vmem:[#allocation3] sm:$0xff]
    %v34 = vld [vmem:[#allocation3 + $0x8] sm:$0xff]
    %v35 = vld [vmem:[#allocation3 + $0x10] sm:$0xff]
    %v36 = vld [vmem:[#allocation3 + $0x18] sm:$0xff]
    %v37 = vld [vmem:[#allocation3 + $0x20] sm:$0xff]
    %v38 = vld [vmem:[#allocation3 + $0x28] sm:$0xff]
    %39 = vst [vmem:[#allocation2] sm:$0xff] %v33
    %40 = vst [vmem:[#allocation2 + $0x8] sm:$0xff] %v34
    %41 = vst [vmem:[#allocation2 + $0x10] sm:$0xff] %v35
    %42 = vst [vmem:[#allocation2 + $0x18] sm:$0xff] %v36
    %43 = vst [vmem:[#allocation2 + $0x20] sm:$0xff] %v37
    %44 = vst [vmem:[#allocation2 + $0x28] sm:$0xff] %v38
    %v45 = vld [vmem:[#allocation3] sm:$0xff]
    %v46 = vld [vmem:[#allocation3 + $0x8] sm:$0xff]
    %v47 = vld [vmem:[#allocation3 + $0x10] sm:$0xff]
    %v48 = vld [vmem:[#allocation3 + $0x18] sm:$0xff]
    %v49 = vld [vmem:[#allocation3 + $0x20] sm:$0xff]
    %v50 = vld [vmem:[#allocation3 + $0x28] sm:$0xff]
    %v51 = vld [vmem:[#allocation3 + $0x30] sm:$0xff]
    %59 = vrot.lane.b32.xlu0 %v45, 127
    %v60 = vpop.permute.xlu0 %59
    %61 = vrot.lane.b32.xlu0 %v46, 127
    %v62 = vpop.permute.xlu0 %61
    %63 = vrot.lane.b32.xlu0 %v47, 127
    %v64 = vpop.permute.xlu0 %63
    %65 = vrot.lane.b32.xlu0 %v48, 127
    %v66 = vpop.permute.xlu0 %65
    %67 = vrot.lane.b32.xlu0 %v49, 127
    %v68 = vpop.permute.xlu0 %67
    %69 = vrot.lane.b32.xlu0 %v50, 127
    %v70 = vpop.permute.xlu0 %69
    %71 = vrot.lane.b32.xlu0 %v51, 127
    %v72 = vpop.permute.xlu0 %71
    %vm73 = vcmask 1039360
    %v74 = vsel %vm73, %v60, %v62
    %v75 = vsel %vm73, %v62, %v64
    %v76 = vsel %vm73, %v64, %v66
    %v77 = vsel %vm73, %v66, %v68
    %v78 = vsel %vm73, %v68, %v70
    %v79 = vsel %vm73, %v70, %v72
    %86 = vst [vmem:[#allocation2 + $0x30] sm:$0xff] %v74
    %87 = vst [vmem:[#allocation2 + $0x38] sm:$0xff] %v75
    %88 = vst [vmem:[#allocation2 + $0x40] sm:$0xff] %v76
    %89 = vst [vmem:[#allocation2 + $0x48] sm:$0xff] %v77
    %90 = vst [vmem:[#allocation2 + $0x50] sm:$0xff] %v78
    %91 = vst [vmem:[#allocation2 + $0x58] sm:$0xff] %v79
    %v92 = vld [vmem:[#allocation3] sm:$0xff]
    %v93 = vld [vmem:[#allocation3 + $0x8] sm:$0xff]
    %v94 = vld [vmem:[#allocation3 + $0x10] sm:$0xff]
    %v95 = vld [vmem:[#allocation3 + $0x18] sm:$0xff]
    %v96 = vld [vmem:[#allocation3 + $0x20] sm:$0xff]
    %v97 = vld [vmem:[#allocation3 + $0x28] sm:$0xff]
    %v98 = vld [vmem:[#allocation3 + $0x30] sm:$0xff]
    %106 = vrot.lane.b32.xlu0 %v92, 126
    %v107 = vpop.permute.xlu0 %106
    %108 = vrot.lane.b32.xlu0 %v93, 126
    %v109 = vpop.permute.xlu0 %108
    %110 = vrot.lane.b32.xlu0 %v94, 126
    %v111 = vpop.permute.xlu0 %110
    %112 = vrot.lane.b32.xlu0 %v95, 126
    %v113 = vpop.permute.xlu0 %112
    %114 = vrot.lane.b32.xlu0 %v96, 126
    %v115 = vpop.permute.xlu0 %114
    %116 = vrot.lane.b32.xlu0 %v97, 126
    %v117 = vpop.permute.xlu0 %116
    %118 = vrot.lane.b32.xlu0 %v98, 126
    %v119 = vpop.permute.xlu0 %118
    %vm120 = vcmask 1031168
    %v121 = vsel %vm120, %v107, %v109
    %v122 = vsel %vm120, %v109, %v111
    %v123 = vsel %vm120, %v111, %v113
    %v124 = vsel %vm120, %v113, %v115
    %v125 = vsel %vm120, %v115, %v117
    %v126 = vsel %vm120, %v117, %v119
    %133 = vst [vmem:[#allocation2 + $0x60] sm:$0xff] %v121
    %134 = vst [vmem:[#allocation2 + $0x68] sm:$0xff] %v122
    %135 = vst [vmem:[#allocation2 + $0x70] sm:$0xff] %v123
    %136 = vst [vmem:[#allocation2 + $0x78] sm:$0xff] %v124
    %137 = vst [vmem:[#allocation2 + $0x80] sm:$0xff] %v125
    %138 = vst [vmem:[#allocation2 + $0x88] sm:$0xff] %v126
    %v139 = vld [vmem:[#allocation3] sm:$0xff]
    %v140 = vld [vmem:[#allocation3 + $0x8] sm:$0xff]
    %v141 = vld [vmem:[#allocation3 + $0x10] sm:$0xff]
    %v142 = vld [vmem:[#allocation3 + $0x18] sm:$0xff]
    %v143 = vld [vmem:[#allocation3 + $0x20] sm:$0xff]
    %v144 = vld [vmem:[#allocation3 + $0x28] sm:$0xff]
    %v145 = vld [vmem:[#allocation3 + $0x30] sm:$0xff]
    %153 = vrot.lane.b32.xlu0 %v139, 110
    %v154 = vpop.permute.xlu0 %153
    %155 = vrot.lane.b32.xlu0 %v140, 110
    %v156 = vpop.permute.xlu0 %155
    %157 = vrot.lane.b32.xlu0 %v141, 110
    %v158 = vpop.permute.xlu0 %157
    %159 = vrot.lane.b32.xlu0 %v142, 110
    %v160 = vpop.permute.xlu0 %159
    %161 = vrot.lane.b32.xlu0 %v143, 110
    %v162 = vpop.permute.xlu0 %161
    %163 = vrot.lane.b32.xlu0 %v144, 110
    %v164 = vpop.permute.xlu0 %163
    %165 = vrot.lane.b32.xlu0 %v145, 110
    %v166 = vpop.permute.xlu0 %165
    %vm167 = vcmask 900096
    %v168 = vsel %vm167, %v154, %v156
    %v169 = vsel %vm167, %v156, %v158
    %v170 = vsel %vm167, %v158, %v160
    %v171 = vsel %vm167, %v160, %v162
    %v172 = vsel %vm167, %v162, %v164
    %v173 = vsel %vm167, %v164, %v166
    %180 = vst [vmem:[#allocation2 + $0x90] sm:$0xff] %v168
    %181 = vst [vmem:[#allocation2 + $0x98] sm:$0xff] %v169
    %182 = vst [vmem:[#allocation2 + $0xa0] sm:$0xff] %v170
    %183 = vst [vmem:[#allocation2 + $0xa8] sm:$0xff] %v171
    %184 = vst [vmem:[#allocation2 + $0xb0] sm:$0xff] %v172
    %185 = vst [vmem:[#allocation2 + $0xb8] sm:$0xff] %v173
    %v186 = vld [vmem:[#allocation3] sm:$0xff]
    %v187 = vld [vmem:[#allocation3 + $0x8] sm:$0xff]
    %v188 = vld [vmem:[#allocation3 + $0x10] sm:$0xff]
    %v189 = vld [vmem:[#allocation3 + $0x18] sm:$0xff]
    %v190 = vld [vmem:[#allocation3 + $0x20] sm:$0xff]
    %v191 = vld [vmem:[#allocation3 + $0x28] sm:$0xff]
    %v192 = vld [vmem:[#allocation3 + $0x30] sm:$0xff]
    %200 = vrot.lane.b32.xlu0 %v186, 109
    %v201 = vpop.permute.xlu0 %200
    %202 = vrot.lane.b32.xlu0 %v187, 109
    %v203 = vpop.permute.xlu0 %202
    %204 = vrot.lane.b32.xlu0 %v188, 109
    %v205 = vpop.permute.xlu0 %204
    %206 = vrot.lane.b32.xlu0 %v189, 109
    %v207 = vpop.permute.xlu0 %206
    %208 = vrot.lane.b32.xlu0 %v190, 109
    %v209 = vpop.permute.xlu0 %208
    %210 = vrot.lane.b32.xlu0 %v191, 109
    %v211 = vpop.permute.xlu0 %210
    %212 = vrot.lane.b32.xlu0 %v192, 109
    %v213 = vpop.permute.xlu0 %212
    %vm214 = vcmask 891904
    %v215 = vsel %vm214, %v201, %v203
    %v216 = vsel %vm214, %v203, %v205
    %v217 = vsel %vm214, %v205, %v207
    %v218 = vsel %vm214, %v207, %v209
    %v219 = vsel %vm214, %v209, %v211
    %v220 = vsel %vm214, %v211, %v213
    %227 = vst [vmem:[#allocation2 + $0xc0] sm:$0xff] %v215
    %228 = vst [vmem:[#allocation2 + $0xc8] sm:$0xff] %v216
    %229 = vst [vmem:[#allocation2 + $0xd0] sm:$0xff] %v217
    %230 = vst [vmem:[#allocation2 + $0xd8] sm:$0xff] %v218
    %231 = vst [vmem:[#allocation2 + $0xe0] sm:$0xff] %v219
    %232 = vst [vmem:[#allocation2 + $0xe8] sm:$0xff] %v220
    %v233 = vld [vmem:[#allocation3] sm:$0xff]
    %v234 = vld [vmem:[#allocation3 + $0x8] sm:$0xff]
    %v235 = vld [vmem:[#allocation3 + $0x10] sm:$0xff]
    %v236 = vld [vmem:[#allocation3 + $0x18] sm:$0xff]
    %v237 = vld [vmem:[#allocation3 + $0x20] sm:$0xff]
    %v238 = vld [vmem:[#allocation3 + $0x28] sm:$0xff]
    %v239 = vld [vmem:[#allocation3 + $0x30] sm:$0xff]
    %247 = vrot.lane.b32.xlu0 %v233, 108
    %v248 = vpop.permute.xlu0 %247
    %249 = vrot.lane.b32.xlu0 %v234, 108
    %v250 = vpop.permute.xlu0 %249
    %251 = vrot.lane.b32.xlu0 %v235, 108
    %v252 = vpop.permute.xlu0 %251
    %253 = vrot.lane.b32.xlu0 %v236, 108
    %v254 = vpop.permute.xlu0 %253
    %255 = vrot.lane.b32.xlu0 %v237, 108
    %v256 = vpop.permute.xlu0 %255
    %257 = vrot.lane.b32.xlu0 %v238, 108
    %v258 = vpop.permute.xlu0 %257
    %259 = vrot.lane.b32.xlu0 %v239, 108
    %v260 = vpop.permute.xlu0 %259
    %vm261 = vcmask 883712
    %v262 = vsel %vm261, %v248, %v250
    %v263 = vsel %vm261, %v250, %v252
    %v264 = vsel %vm261, %v252, %v254
    %v265 = vsel %vm261, %v254, %v256
    %v266 = vsel %vm261, %v256, %v258
    %v267 = vsel %vm261, %v258, %v260
    %274 = vst [vmem:[#allocation2 + $0xf0] sm:$0xff] %v262
    %275 = vst [vmem:[#allocation2 + $0xf8] sm:$0xff] %v263
    %276 = vst [vmem:[#allocation2 + $0x100] sm:$0xff] %v264
    %277 = vst [vmem:[#allocation2 + $0x108] sm:$0xff] %v265
    %278 = vst [vmem:[#allocation2 + $0x110] sm:$0xff] %v266
    %279 = vst [vmem:[#allocation2 + $0x118] sm:$0xff] %v267
    %v280 = vld [vmem:[#allocation3] sm:$0xff]
    %v281 = vld [vmem:[#allocation3 + $0x8] sm:$0xff]
    %v282 = vld [vmem:[#allocation3 + $0x10] sm:$0xff]
    %v283 = vld [vmem:[#allocation3 + $0x18] sm:$0xff]
    %v284 = vld [vmem:[#allocation3 + $0x20] sm:$0xff]
    %v285 = vld [vmem:[#allocation3 + $0x28] sm:$0xff]
    %v286 = vld [vmem:[#allocation3 + $0x30] sm:$0xff]
    %294 = vrot.lane.b32.xlu0 %v280, 92
    %v295 = vpop.permute.xlu0 %294
    %296 = vrot.lane.b32.xlu0 %v281, 92
    %v297 = vpop.permute.xlu0 %296
    %298 = vrot.lane.b32.xlu0 %v282, 92
    %v299 = vpop.permute.xlu0 %298
    %300 = vrot.lane.b32.xlu0 %v283, 92
    %v301 = vpop.permute.xlu0 %300
    %302 = vrot.lane.b32.xlu0 %v284, 92
    %v303 = vpop.permute.xlu0 %302
    %304 = vrot.lane.b32.xlu0 %v285, 92
    %v305 = vpop.permute.xlu0 %304
    %306 = vrot.lane.b32.xlu0 %v286, 92
    %v307 = vpop.permute.xlu0 %306
    %vm308 = vcmask 752640
    %v309 = vsel %vm308, %v295, %v297
    %v310 = vsel %vm308, %v297, %v299
    %v311 = vsel %vm308, %v299, %v301
    %v312 = vsel %vm308, %v301, %v303
    %v313 = vsel %vm308, %v303, %v305
    %v314 = vsel %vm308, %v305, %v307
    %321 = vst [vmem:[#allocation2 + $0x120] sm:$0xff] %v309
    %322 = vst [vmem:[#allocation2 + $0x128] sm:$0xff] %v310
    %323 = vst [vmem:[#allocation2 + $0x130] sm:$0xff] %v311
    %324 = vst [vmem:[#allocation2 + $0x138] sm:$0xff] %v312
    %325 = vst [vmem:[#allocation2 + $0x140] sm:$0xff] %v313
    %326 = vst [vmem:[#allocation2 + $0x148] sm:$0xff] %v314
    %v327 = vld [vmem:[#allocation3] sm:$0xff]
    %v328 = vld [vmem:[#allocation3 + $0x8] sm:$0xff]
    %v329 = vld [vmem:[#allocation3 + $0x10] sm:$0xff]
    %v330 = vld [vmem:[#allocation3 + $0x18] sm:$0xff]
    %v331 = vld [vmem:[#allocation3 + $0x20] sm:$0xff]
    %v332 = vld [vmem:[#allocation3 + $0x28] sm:$0xff]
    %v333 = vld [vmem:[#allocation3 + $0x30] sm:$0xff]
    %341 = vrot.lane.b32.xlu0 %v327, 91
    %v342 = vpop.permute.xlu0 %341
    %343 = vrot.lane.b32.xlu0 %v328, 91
    %v344 = vpop.permute.xlu0 %343
    %345 = vrot.lane.b32.xlu0 %v329, 91
    %v346 = vpop.permute.xlu0 %345
    %347 = vrot.lane.b32.xlu0 %v330, 91
    %v348 = vpop.permute.xlu0 %347
    %349 = vrot.lane.b32.xlu0 %v331, 91
    %v350 = vpop.permute.xlu0 %349
    %351 = vrot.lane.b32.xlu0 %v332, 91
    %v352 = vpop.permute.xlu0 %351
    %353 = vrot.lane.b32.xlu0 %v333, 91
    %v354 = vpop.permute.xlu0 %353
    %vm355 = vcmask 744448
    %v356 = vsel %vm355, %v342, %v344
    %v357 = vsel %vm355, %v344, %v346
    %v358 = vsel %vm355, %v346, %v348
    %v359 = vsel %vm355, %v348, %v350
    %v360 = vsel %vm355, %v350, %v352
    %v361 = vsel %vm355, %v352, %v354
    %368 = vst [vmem:[#allocation2 + $0x150] sm:$0xff] %v356
    %369 = vst [vmem:[#allocation2 + $0x158] sm:$0xff] %v357
    %370 = vst [vmem:[#allocation2 + $0x160] sm:$0xff] %v358
    %371 = vst [vmem:[#allocation2 + $0x168] sm:$0xff] %v359
    %372 = vst [vmem:[#allocation2 + $0x170] sm:$0xff] %v360
    %373 = vst [vmem:[#allocation2 + $0x178] sm:$0xff] %v361
    %v374 = vld [vmem:[#allocation3] sm:$0xff]
    %v375 = vld [vmem:[#allocation3 + $0x8] sm:$0xff]
    %v376 = vld [vmem:[#allocation3 + $0x10] sm:$0xff]
    %v377 = vld [vmem:[#allocation3 + $0x18] sm:$0xff]
    %v378 = vld [vmem:[#allocation3 + $0x20] sm:$0xff]
    %v379 = vld [vmem:[#allocation3 + $0x28] sm:$0xff]
    %v380 = vld [vmem:[#allocation3 + $0x30] sm:$0xff]
    %388 = vrot.lane.b32.xlu0 %v374, 90
    %v389 = vpop.permute.xlu0 %388
    %390 = vrot.lane.b32.xlu0 %v375, 90
    %v391 = vpop.permute.xlu0 %390
    %392 = vrot.lane.b32.xlu0 %v376, 90
    %v393 = vpop.permute.xlu0 %392
    %394 = vrot.lane.b32.xlu0 %v377, 90
    %v395 = vpop.permute.xlu0 %394
    %396 = vrot.lane.b32.xlu0 %v378, 90
    %v397 = vpop.permute.xlu0 %396
    %398 = vrot.lane.b32.xlu0 %v379, 90
    %v399 = vpop.permute.xlu0 %398
    %400 = vrot.lane.b32.xlu0 %v380, 90
    %v401 = vpop.permute.xlu0 %400
    %vm402 = vcmask 736256
    %v403 = vsel %vm402, %v389, %v391
    %v404 = vsel %vm402, %v391, %v393
    %v405 = vsel %vm402, %v393, %v395
    %v406 = vsel %vm402, %v395, %v397
    %v407 = vsel %vm402, %v397, %v399
    %v408 = vsel %vm402, %v399, %v401
    %415 = vst [vmem:[#allocation2 + $0x180] sm:$0xff] %v403
    %416 = vst [vmem:[#allocation2 + $0x188] sm:$0xff] %v404
    %417 = vst [vmem:[#allocation2 + $0x190] sm:$0xff] %v405
    %418 = vst [vmem:[#allocation2 + $0x198] sm:$0xff] %v406
    %419 = vst [vmem:[#allocation2 + $0x1a0] sm:$0xff] %v407
    %420 = vst [vmem:[#allocation2 + $0x1a8] sm:$0xff] %v408
    %v421 = vld [vmem:[%s1] sm:$0xff]
    %v422 = vld [vmem:[#allocation2] sm:$0xff]
    %v423 = vld [vmem:[#allocation2 + $0x8] sm:$0xff]
    %v424 = vld [vmem:[#allocation2 + $0x10] sm:$0xff]
    %v425 = vld [vmem:[#allocation2 + $0x18] sm:$0xff]
    %v426 = vld [vmem:[#allocation2 + $0x20] sm:$0xff]
    %v427 = vld [vmem:[#allocation2 + $0x28] sm:$0xff]
    %v428 = vld [vmem:[#allocation2 + $0x30] sm:$0xff]
    %v429 = vld [vmem:[#allocation2 + $0x38] sm:$0xff]
    %v430 = vld [vmem:[#allocation2 + $0x40] sm:$0xff]
    %v431 = vld [vmem:[#allocation2 + $0x48] sm:$0xff]
    %v432 = vld [vmem:[#allocation2 + $0x50] sm:$0xff]
    %v433 = vld [vmem:[#allocation2 + $0x58] sm:$0xff]
    %v434 = vld [vmem:[#allocation2 + $0x60] sm:$0xff]
    %v435 = vld [vmem:[#allocation2 + $0x68] sm:$0xff]
    %v436 = vld [vmem:[#allocation2 + $0x70] sm:$0xff]
    %v437 = vld [vmem:[#allocation2 + $0x78] sm:$0xff]
    %v438 = vld [vmem:[#allocation2 + $0x80] sm:$0xff]
    %v439 = vld [vmem:[#allocation2 + $0x88] sm:$0xff]
    %v440 = vld [vmem:[#allocation2 + $0x90] sm:$0xff]
    %v441 = vld [vmem:[#allocation2 + $0x98] sm:$0xff]
    %v442 = vld [vmem:[#allocation2 + $0xa0] sm:$0xff]
    %v443 = vld [vmem:[#allocation2 + $0xa8] sm:$0xff]
    %v444 = vld [vmem:[#allocation2 + $0xb0] sm:$0xff]
    %v445 = vld [vmem:[#allocation2 + $0xb8] sm:$0xff]
    %v446 = vld [vmem:[#allocation2 + $0xc0] sm:$0xff]
    %v447 = vld [vmem:[#allocation2 + $0xc8] sm:$0xff]
    %v448 = vld [vmem:[#allocation2 + $0xd0] sm:$0xff]
    %v449 = vld [vmem:[#allocation2 + $0xd8] sm:$0xff]
    %v450 = vld [vmem:[#allocation2 + $0xe0] sm:$0xff]
    %v451 = vld [vmem:[#allocation2 + $0xe8] sm:$0xff]
    %v452 = vld [vmem:[#allocation2 + $0xf0] sm:$0xff]
    %v453 = vld [vmem:[#allocation2 + $0xf8] sm:$0xff]
    %v454 = vld [vmem:[#allocation2 + $0x100] sm:$0xff]
    %v455 = vld [vmem:[#allocation2 + $0x108] sm:$0xff]
    %v456 = vld [vmem:[#allocation2 + $0x110] sm:$0xff]
    %v457 = vld [vmem:[#allocation2 + $0x118] sm:$0xff]
    %v458 = vld [vmem:[#allocation2 + $0x120] sm:$0xff]
    %v459 = vld [vmem:[#allocation2 + $0x128] sm:$0xff]
    %v460 = vld [vmem:[#allocation2 + $0x130] sm:$0xff]
    %v461 = vld [vmem:[#allocation2 + $0x138] sm:$0xff]
    %v462 = vld [vmem:[#allocation2 + $0x140] sm:$0xff]
    %v463 = vld [vmem:[#allocation2 + $0x148] sm:$0xff]
    %v464 = vld [vmem:[#allocation2 + $0x150] sm:$0xff]
    %v465 = vld [vmem:[#allocation2 + $0x158] sm:$0xff]
    %v466 = vld [vmem:[#allocation2 + $0x160] sm:$0xff]
    %v467 = vld [vmem:[#allocation2 + $0x168] sm:$0xff]
    %v468 = vld [vmem:[#allocation2 + $0x170] sm:$0xff]
    %v469 = vld [vmem:[#allocation2 + $0x178] sm:$0xff]
    %v470 = vld [vmem:[#allocation2 + $0x180] sm:$0xff]
    %v471 = vld [vmem:[#allocation2 + $0x188] sm:$0xff]
    %v472 = vld [vmem:[#allocation2 + $0x190] sm:$0xff]
    %v473 = vld [vmem:[#allocation2 + $0x198] sm:$0xff]
    %v474 = vld [vmem:[#allocation2 + $0x1a0] sm:$0xff]
    %v475 = vld [vmem:[#allocation2 + $0x1a8] sm:$0xff]
    %vm476 = vcmask 588800
    %v478 = vsel %vm476, %v421, 0
    %480 = vmatprep.subr.mxu0 0.0
    %481 = vmatpush1.msra.mxu0 0.0
    %482 = vmatprep.subr.mxu0 0.0
    %483 = vmatpush1.msra.mxu0 0.0
    %484 = vmatprep.subr.mxu0 0.0
    %485 = vmatpush1.msra.mxu0 0.0
    %486 = vmatprep.subr.mxu0 0.0
    %487 = vmatpush1.msra.mxu0 0.0
    %488 = vmatprep.subr.mxu0 0.0
    %489 = vmatpush1.msra.mxu0 0.0
    %490 = vmatprep.subr.mxu0 0.0
    %491 = vmatpush1.msra.mxu0 0.0
    %492 = vmatprep.subr.mxu0 0.0
    %493 = vmatpush1.msra.mxu0 0.0
    %494 = vmatprep.subr.mxu0 %v471
    %495 = vmatpush1.msra.mxu0 %v470
    %496 = vmatprep.subr.mxu0 %v465
    %497 = vmatpush1.msra.mxu0 %v464
    %498 = vmatprep.subr.mxu0 %v459
    %499 = vmatpush1.msra.mxu0 %v458
    %500 = vmatprep.subr.mxu0 %v453
    %501 = vmatpush1.msra.mxu0 %v452
    %502 = vmatprep.subr.mxu0 %v447
    %503 = vmatpush1.msra.mxu0 %v446
    %504 = vmatprep.subr.mxu0 %v441
    %505 = vmatpush1.msra.mxu0 %v440
    %506 = vmatprep.subr.mxu0 %v435
    %507 = vmatpush1.msra.mxu0 %v434
    %508 = vmatprep.subr.mxu0 %v429
    %509 = vmatpush1.msra.mxu0 %v428
    %510 = vmatprep.subr.mxu0 %v423
    %511 = vmatpush1.msra.mxu0 %v422
    %512 = vmatprep.subr.mxu0 0.0
    %513 = vmatpush2.msra.mxu0 0.0
    %514 = vmatprep.subr.mxu0 0.0
    %515 = vmatpush2.msra.mxu0 0.0
    %516 = vmatprep.subr.mxu0 0.0
    %517 = vmatpush2.msra.mxu0 0.0
    %518 = vmatprep.subr.mxu0 0.0
    %519 = vmatpush2.msra.mxu0 0.0
    %520 = vmatprep.subr.mxu0 0.0
    %521 = vmatpush2.msra.mxu0 0.0
    %522 = vmatprep.subr.mxu0 0.0
    %523 = vmatpush2.msra.mxu0 0.0
    %524 = vmatprep.subr.mxu0 0.0
    %525 = vmatpush2.msra.mxu0 0.0
    %526 = vmatprep.subr.mxu0 0.0
    %527 = vmatpush2.msra.mxu0 0.0
    %528 = vmatprep.subr.mxu0 0.0
    %529 = vmatpush2.msra.mxu0 0.0
    %530 = vmatprep.subr.mxu0 0.0
    %531 = vmatpush2.msra.mxu0 0.0
    %532 = vmatprep.subr.mxu0 0.0
    %533 = vmatpush2.msra.mxu0 0.0
    %534 = vmatprep.subr.mxu0 0.0
    %535 = vmatpush2.msra.mxu0 0.0
    %536 = vmatprep.subr.mxu0 0.0
    %537 = vmatpush2.msra.mxu0 0.0
    %538 = vmatprep.subr.mxu0 0.0
    %539 = vmatpush2.msra.mxu0 0.0
    %540 = vmatprep.subr.mxu0 0.0
    %541 = vmatpush2.msra.mxu0 0.0
    %542 = vmatprep.subr.mxu0 0.0
    %543 = vmatpush2.msra.mxu0 0.0
    %544 = vmatprep.mubr.f32.mxu0 0.0
    %545 = vmatmul.mubr.f32.gmra.mxu0 %v478
    %v546 = vpop.f32.mrf.mxu0
    %v547 = vadd.f32 0.0, %v546
    %v548 = vpop.f32.mrf.mxu0
    %v549 = vadd.f32 0.0, %v548
    %550 = vdwg.mxu0
    %551 = vmatprep.subr.mxu0 0.0
    %552 = vmatpush1.msra.mxu0 0.0
    %553 = vmatprep.subr.mxu0 0.0
    %554 = vmatpush1.msra.mxu0 0.0
    %555 = vmatprep.subr.mxu0 0.0
    %556 = vmatpush1.msra.mxu0 0.0
    %557 = vmatprep.subr.mxu0 0.0
    %558 = vmatpush1.msra.mxu0 0.0
    %559 = vmatprep.subr.mxu0 0.0
    %560 = vmatpush1.msra.mxu0 0.0
    %561 = vmatprep.subr.mxu0 0.0
    %562 = vmatpush1.msra.mxu0 0.0
    %563 = vmatprep.subr.mxu0 0.0
    %564 = vmatpush1.msra.mxu0 0.0
    %565 = vmatprep.subr.mxu0 %v473
    %566 = vmatpush1.msra.mxu0 %v472
    %567 = vmatprep.subr.mxu0 %v467
    %568 = vmatpush1.msra.mxu0 %v466
    %569 = vmatprep.subr.mxu0 %v461
    %570 = vmatpush1.msra.mxu0 %v460
    %571 = vmatprep.subr.mxu0 %v455
    %572 = vmatpush1.msra.mxu0 %v454
    %573 = vmatprep.subr.mxu0 %v449
    %574 = vmatpush1.msra.mxu0 %v448
    %575 = vmatprep.subr.mxu0 %v443
    %576 = vmatpush1.msra.mxu0 %v442
    %577 = vmatprep.subr.mxu0 %v437
    %578 = vmatpush1.msra.mxu0 %v436
    %579 = vmatprep.subr.mxu0 %v431
    %580 = vmatpush1.msra.mxu0 %v430
    %581 = vmatprep.subr.mxu0 %v425
    %582 = vmatpush1.msra.mxu0 %v424
    %583 = vmatprep.subr.mxu0 0.0
    %584 = vmatpush2.msra.mxu0 0.0
    %585 = vmatprep.subr.mxu0 0.0
    %586 = vmatpush2.msra.mxu0 0.0
    %587 = vmatprep.subr.mxu0 0.0
    %588 = vmatpush2.msra.mxu0 0.0
    %589 = vmatprep.subr.mxu0 0.0
    %590 = vmatpush2.msra.mxu0 0.0
    %591 = vmatprep.subr.mxu0 0.0
    %592 = vmatpush2.msra.mxu0 0.0
    %593 = vmatprep.subr.mxu0 0.0
    %594 = vmatpush2.msra.mxu0 0.0
    %595 = vmatprep.subr.mxu0 0.0
    %596 = vmatpush2.msra.mxu0 0.0
    %597 = vmatprep.subr.mxu0 0.0
    %598 = vmatpush2.msra.mxu0 0.0
    %599 = vmatprep.subr.mxu0 0.0
    %600 = vmatpush2.msra.mxu0 0.0
    %601 = vmatprep.subr.mxu0 0.0
    %602 = vmatpush2.msra.mxu0 0.0
    %603 = vmatprep.subr.mxu0 0.0
    %604 = vmatpush2.msra.mxu0 0.0
    %605 = vmatprep.subr.mxu0 0.0
    %606 = vmatpush2.msra.mxu0 0.0
    %607 = vmatprep.subr.mxu0 0.0
    %608 = vmatpush2.msra.mxu0 0.0
    %609 = vmatprep.subr.mxu0 0.0
    %610 = vmatpush2.msra.mxu0 0.0
    %611 = vmatprep.subr.mxu0 0.0
    %612 = vmatpush2.msra.mxu0 0.0
    %613 = vmatprep.subr.mxu0 0.0
    %614 = vmatpush2.msra.mxu0 0.0
    %615 = vmatprep.mubr.f32.mxu0 0.0
    %616 = vmatmul.mubr.f32.gmra.mxu0 %v478
    %v617 = vpop.f32.mrf.mxu0
    %v618 = vadd.f32 0.0, %v617
    %v619 = vpop.f32.mrf.mxu0
    %v620 = vadd.f32 0.0, %v619
    %621 = vdwg.mxu0
    %622 = vmatprep.subr.mxu0 0.0
    %623 = vmatpush1.msra.mxu0 0.0
    %624 = vmatprep.subr.mxu0 0.0
    %625 = vmatpush1.msra.mxu0 0.0
    %626 = vmatprep.subr.mxu0 0.0
    %627 = vmatpush1.msra.mxu0 0.0
    %628 = vmatprep.subr.mxu0 0.0
    %629 = vmatpush1.msra.mxu0 0.0
    %630 = vmatprep.subr.mxu0 0.0
    %631 = vmatpush1.msra.mxu0 0.0
    %632 = vmatprep.subr.mxu0 0.0
    %633 = vmatpush1.msra.mxu0 0.0
    %634 = vmatprep.subr.mxu0 0.0
    %635 = vmatpush1.msra.mxu0 0.0
    %636 = vmatprep.subr.mxu0 %v475
    %637 = vmatpush1.msra.mxu0 %v474
    %638 = vmatprep.subr.mxu0 %v469
    %639 = vmatpush1.msra.mxu0 %v468
    %640 = vmatprep.subr.mxu0 %v463
    %641 = vmatpush1.msra.mxu0 %v462
    %642 = vmatprep.subr.mxu0 %v457
    %643 = vmatpush1.msra.mxu0 %v456
    %644 = vmatprep.subr.mxu0 %v451
    %645 = vmatpush1.msra.mxu0 %v450
    %646 = vmatprep.subr.mxu0 %v445
    %647 = vmatpush1.msra.mxu0 %v444
    %648 = vmatprep.subr.mxu0 %v439
    %649 = vmatpush1.msra.mxu0 %v438
    %650 = vmatprep.subr.mxu0 %v433
    %651 = vmatpush1.msra.mxu0 %v432
    %652 = vmatprep.subr.mxu0 %v427
    %653 = vmatpush1.msra.mxu0 %v426
    %654 = vmatprep.subr.mxu0 0.0
    %655 = vmatpush2.msra.mxu0 0.0
    %656 = vmatprep.subr.mxu0 0.0
    %657 = vmatpush2.msra.mxu0 0.0
    %658 = vmatprep.subr.mxu0 0.0
    %659 = vmatpush2.msra.mxu0 0.0
    %660 = vmatprep.subr.mxu0 0.0
    %661 = vmatpush2.msra.mxu0 0.0
    %662 = vmatprep.subr.mxu0 0.0
    %663 = vmatpush2.msra.mxu0 0.0
    %664 = vmatprep.subr.mxu0 0.0
    %665 = vmatpush2.msra.mxu0 0.0
    %666 = vmatprep.subr.mxu0 0.0
    %667 = vmatpush2.msra.mxu0 0.0
    %668 = vmatprep.subr.mxu0 0.0
    %669 = vmatpush2.msra.mxu0 0.0
    %670 = vmatprep.subr.mxu0 0.0
    %671 = vmatpush2.msra.mxu0 0.0
    %672 = vmatprep.subr.mxu0 0.0
    %673 = vmatpush2.msra.mxu0 0.0
    %674 = vmatprep.subr.mxu0 0.0
    %675 = vmatpush2.msra.mxu0 0.0
    %676 = vmatprep.subr.mxu0 0.0
    %677 = vmatpush2.msra.mxu0 0.0
    %678 = vmatprep.subr.mxu0 0.0
    %679 = vmatpush2.msra.mxu0 0.0
    %680 = vmatprep.subr.mxu0 0.0
    %681 = vmatpush2.msra.mxu0 0.0
    %682 = vmatprep.subr.mxu0 0.0
    %683 = vmatpush2.msra.mxu0 0.0
    %684 = vmatprep.subr.mxu0 0.0
    %685 = vmatpush2.msra.mxu0 0.0
    %686 = vmatprep.mubr.f32.mxu0 0.0
    %687 = vmatmul.mubr.f32.gmra.mxu0 %v478
    %v688 = vpop.f32.mrf.mxu0
    %v689 = vadd.f32 0.0, %v688
    %v690 = vpop.f32.mrf.mxu0
    %v691 = vadd.f32 0.0, %v690
    %692 = vdwg.mxu0
    %v693 = vld [vmem:[%s4] sm:$0x3f]
    %v695 = vlaneseq
    %v696 = vshrl.u32 %v695, 7
    %v697 = vsub.s32 0, %v696
    %v698 = vrot.slane %v693, %v697
    %v699 = vlaneseq
    %v700 = vshrl.u32 %v699, 7
    %v701 = vsub.s32 1, %v700
    %v702 = vrot.slane %v693, %v701
    %v703 = vlaneseq
    %v704 = vshrl.u32 %v703, 7
    %v705 = vsub.s32 2, %v704
    %v706 = vrot.slane %v693, %v705
    %v707 = vlaneseq
    %v708 = vshrl.u32 %v707, 7
    %v709 = vsub.s32 3, %v708
    %v710 = vrot.slane %v693, %v709
    %v711 = vlaneseq
    %v712 = vshrl.u32 %v711, 7
    %v713 = vsub.s32 4, %v712
    %v714 = vrot.slane %v693, %v713
    %v715 = vlaneseq
    %v716 = vshrl.u32 %v715, 7
    %v717 = vsub.s32 5, %v716
    %v718 = vrot.slane %v693, %v717
    %v725 = vmul.f32 %v547, %v698
    %v726 = vmul.f32 %v549, %v702
    %v727 = vmul.f32 %v618, %v706
    %v728 = vmul.f32 %v620, %v710
    %v729 = vmul.f32 %v689, %v714
    %v730 = vmul.f32 %v691, %v718
    %v731 = vadd.f32 %v725, %v726
    %v732 = vadd.f32 %v731, %v727
    %v733 = vadd.f32 %v732, %v728
    %v734 = vadd.f32 %v733, %v729
    %v735 = vadd.f32 %v734, %v730
    %736 = vadd.xlane.f32.xlu0 %v735
    %v737 = vpop.xlane.xlu0 %736
    %v738 = vmul.f32 %v737, 0.001953125
    %v739 = vsub.f32 %v547, %v738
    %v740 = vsub.f32 %v549, %v738
    %v741 = vsub.f32 %v618, %v738
    %v742 = vsub.f32 %v620, %v738
    %v743 = vsub.f32 %v689, %v738
    %v744 = vsub.f32 %v691, %v738
    %v745 = vmul.f32 %v739, %v698
    %v746 = vmul.f32 %v740, %v702
    %v747 = vmul.f32 %v741, %v706
    %v748 = vmul.f32 %v742, %v710
    %v749 = vmul.f32 %v743, %v714
    %v750 = vmul.f32 %v744, %v718
    %v751 = vmul.f32 %v745, %v739
    %v752 = vmul.f32 %v746, %v740
    %v753 = vmul.f32 %v747, %v741
    %v754 = vmul.f32 %v748, %v742
    %v755 = vmul.f32 %v749, %v743
    %v756 = vmul.f32 %v750, %v744
    %v757 = vadd.f32 %v751, %v752
    %v758 = vadd.f32 %v757, %v753
    %v759 = vadd.f32 %v758, %v754
    %v760 = vadd.f32 %v759, %v755
    %v761 = vadd.f32 %v760, %v756
    %762 = vadd.xlane.f32.xlu0 %v761
    %v763 = vpop.xlane.xlu0 %762
    %v764 = vmul.f32 %v763, 0.001953125
    %v765 = vadd.f32 %v764, 1e-05
    %v766 = vrsqrt.pop %v765
    %v767 = vld [vmem:[%s2] sm:$0xff]
    %v768 = vmul.f32 %v766, %v767
    %770 = vset.pattern.permute.xlu0 0
    %771 = vperm.xlu0 %770, %v768
    %v772 = vpop.permute.xlu0 %771
    %v774 = vmul.f32 %v739, %v772
    %v775 = vmul.f32 %v740, %v772
    %v776 = vmul.f32 %v741, %v772
    %v777 = vmul.f32 %v742, %v772
    %v778 = vmul.f32 %v743, %v772
    %v779 = vmul.f32 %v744, %v772
    %v780 = vld [vmem:[%s3] sm:$0xff]
    %782 = vset.pattern.permute.xlu0 0
    %783 = vperm.xlu0 %782, %v780
    %v784 = vpop.permute.xlu0 %783
    %v786 = vadd.f32 %v774, %v784
    %v787 = vadd.f32 %v775, %v784
    %v788 = vadd.f32 %v776, %v784
    %v789 = vadd.f32 %v777, %v784
    %v790 = vadd.f32 %v778, %v784
    %v791 = vadd.f32 %v779, %v784
    %v792 = vmul.f32 %v786, 0.2
    %v793 = vmul.f32 %v787, 0.2
    %v794 = vmul.f32 %v788, 0.2
    %v795 = vmul.f32 %v789, 0.2
    %v796 = vmul.f32 %v790, 0.2
    %v797 = vmul.f32 %v791, 0.2
    %v798 = vmax.f32 %v786, %v792
    %v799 = vmax.f32 %v787, %v793
    %v800 = vmax.f32 %v788, %v794
    %v801 = vmax.f32 %v789, %v795
    %v802 = vmax.f32 %v790, %v796
    %v803 = vmax.f32 %v791, %v797
    %804 = vst [vmem:[#allocation6] sm:$0xff] %v798
    %805 = vst [vmem:[#allocation6 + $0x8] sm:$0xff] %v799
    %806 = vst [vmem:[#allocation6 + $0x10] sm:$0xff] %v800
    %807 = vst [vmem:[#allocation6 + $0x18] sm:$0xff] %v801
    %808 = vst [vmem:[#allocation6 + $0x20] sm:$0xff] %v802
    %809 = vst [vmem:[#allocation6 + $0x28] sm:$0xff] %v803
    // Predicated region
    $region26: #{tpu_custom_call.1} parent=1 // pred_check
      _
    $region27: #{tpu_custom_call.1} parent=1 // pred_check_branch
      %811 = sbr.rel (0) target = $region29
    $region28: #{tpu_custom_call.1} parent=1 // pred_region
      %s813 = ssub.s32 768, 768
      %814 = vsyncadd [#allocation5], %s813
      %s816 = sshll.u32 [#allocation6], 4
      %s817 = int_to_ptr.vmem [resolvable:$true] %s816
      %819 = dma.vmem_to_hbm [thread:$0]  %s817, 768, %s5, [#allocation5]
    $region29: #{tpu_custom_call.1} parent=1 // pred_fallthru
      _
    // Predicated region
    $region30: #{tpu_custom_call.1} parent=1 // pred_check
      _
    $region31: #{tpu_custom_call.1} parent=1 // pred_check_branch
      %821 = sbr.rel (0) target = $region33
    $region32: #{tpu_custom_call.1} parent=1 // pred_region
      %822 = dma.done [#allocation5], 768
    $region33: #{tpu_custom_call.1} parent=1 // pred_fallthru
      _
    %823 = vsyncpa [#allocation4], 1
    %824 = vsyncpa [#allocation5], 1

</llo_original>
